<compile_context>
chip_gen: v7x
topology: tpu7x:2x2x1
jax: 0.10.0
libtpu: 0.0.40
codegen_flags: <defaults>
</compile_context>

<pallas_src>
import jax
import jax.numpy as jnp
from jax import lax
from jax.experimental import pallas as pl
from jax.experimental.pallas import tpu as pltpu

# --- "constant" module values (defined in-script, deterministic) -------------
PRED_TIME_WINDOW = [0.5, 1.0, 1.5, 2.0]   # length == prediction (4)
MOTION_IN = 90
MOTION_EMBED = 128
BN_EPS = 1e-5
FOV_FINAL_EMBED = MOTION_EMBED + 1        # 129
K_PAD = 128                               # contraction dim padded 90 -> 128


# --- pass 1: per-feature batch statistics of y = x @ w -----------------------
# Zero-padded rows contribute exactly zero to both sums (no bias added here),
# so no masking is needed; the wrapper divides by the true row count.
def _stats_kernel(x_ref, w_ref, sum_ref, sq_ref):
    @pl.when(pl.program_id(0) == 0)
    def _():
        sum_ref[...] = jnp.zeros_like(sum_ref)
        sq_ref[...] = jnp.zeros_like(sq_ref)

    y = jnp.dot(x_ref[...], w_ref[...], preferred_element_type=jnp.float32)
    sum_ref[...] += jnp.sum(y, axis=0, keepdims=True)
    sq_ref[...] += jnp.sum(y * y, axis=0, keepdims=True)


# --- pass 2: recompute y per tile, fused BN affine + ReLU, lane-dense out ----
def _norm_kernel(x_ref, w_ref, scale_ref, shift_ref, z_ref):
    y = jnp.dot(x_ref[...], w_ref[...], preferred_element_type=jnp.float32)
    z_ref[...] = jnp.maximum(y * scale_ref[...] + shift_ref[...], 0.0)


# --- wrapper ------------------------------------------------------------------
def motion_fov_prediction_forward(fov, motion, video, params):
    del video  # unused by the reference forward
    batch, seq = fov.shape[0], fov.shape[1]
    prediction = 4
    tot = batch * seq * prediction
    w, b, gamma, beta = params
    del b  # Linear bias cancels exactly under BatchNorm mean subtraction

    # unique motion rows: each is replicated 4x by the module; BN batch stats
    # over the replicated set equal those over the unique set (exact dedup).
    assert motion.shape[2] == 1, "expects K == 1 (FOV_FINAL_EMBED = 128 + 1)"
    rows = batch * seq
    m = motion.reshape(rows, MOTION_IN).astype(jnp.float32)

    # Row tile: multiple of 8 (f32 sublanes), capped for v7x VMEM headroom.
    tm = min(512, ((rows + 7) // 8) * 8)
    rows_pad = pl.cdiv(rows, tm) * tm
    grid = (rows_pad // tm,)

    # Pad rows to the tile boundary and K from 90 -> 128 (zeros are inert).
    x = jnp.pad(m, ((0, rows_pad - rows), (0, K_PAD - MOTION_IN)))
    w_pad = jnp.pad(w.astype(jnp.float32), ((0, K_PAD - MOTION_IN), (0, 0)))

    x_spec = pl.BlockSpec((tm, K_PAD), lambda i: (i, 0))
    w_spec = pl.BlockSpec((K_PAD, MOTION_EMBED), lambda i: (0, 0))
    vec_spec = pl.BlockSpec((1, MOTION_EMBED), lambda i: (0, 0))

    matmul_flops = 2 * rows_pad * K_PAD * MOTION_EMBED

    # ---- pass 1: batch statistics -------------------------------------------
    s1, s2 = pl.pallas_call(
        _stats_kernel,
        out_shape=(jax.ShapeDtypeStruct((1, MOTION_EMBED), jnp.float32),
                   jax.ShapeDtypeStruct((1, MOTION_EMBED), jnp.float32)),
        grid_spec=pl.GridSpec(
            grid=grid,
            in_specs=[x_spec, w_spec],
            out_specs=(vec_spec, vec_spec),
        ),
        compiler_params=pltpu.CompilerParams(
            dimension_semantics=("arbitrary",)),
        cost_estimate=pl.CostEstimate(
            flops=matmul_flops,
            transcendentals=0,
            bytes_accessed=(rows_pad * K_PAD + K_PAD * MOTION_EMBED
                            + 2 * MOTION_EMBED) * 4),
    )(x, w_pad)

    # Fold BatchNorm (training-mode batch stats, biased variance) + Linear
    # bias into a single per-feature affine: z = (x@w) * scale + shift.
    mean = s1 / rows
    var = jnp.maximum(s2 / rows - mean * mean, 0.0)   # biased variance
    rstd = lax.rsqrt(var + BN_EPS)
    scale = gamma.reshape(1, MOTION_EMBED).astype(jnp.float32) * rstd
    shift = beta.reshape(1, MOTION_EMBED).astype(jnp.float32) - mean * scale

    # ---- pass 2: normalize + ReLU, lane-dense (rows_pad, 128) output --------
    z = pl.pallas_call(
        _norm_kernel,
        out_shape=jax.ShapeDtypeStruct((rows_pad, MOTION_EMBED), jnp.float32),
        grid_spec=pl.GridSpec(
            grid=grid,
            in_specs=[x_spec, w_spec, vec_spec, vec_spec],
            out_specs=pl.BlockSpec((tm, MOTION_EMBED), lambda i: (i, 0)),
        ),
        compiler_params=pltpu.CompilerParams(
            dimension_semantics=("parallel",)),
        cost_estimate=pl.CostEstimate(
            flops=matmul_flops,
            transcendentals=0,
            bytes_accessed=(2 * rows_pad * MOTION_EMBED + rows_pad * K_PAD
                            + K_PAD * MOTION_EMBED + 2 * MOTION_EMBED) * 4),
    )(x, w_pad, scale, shift)

    # Assemble the 129-wide output outside the kernel: replicate each unique
    # row over the 4 prediction steps and prepend the time-window column.
    z = z[:rows]
    z4 = jnp.broadcast_to(z[:, None, :], (rows, prediction, MOTION_EMBED))
    z4 = z4.reshape(tot, MOTION_EMBED)
    tw = jnp.asarray(PRED_TIME_WINDOW, dtype=jnp.float32)[None, :]
    tw = jnp.broadcast_to(tw, (rows, prediction)).reshape(tot, 1)
    return jnp.concatenate([tw, z4], axis=1)


# --- pure-JAX reference (full expansion, for correctness check) ---------------
def reference_forward(fov, motion, params):
    batch, seq = fov.shape[0], fov.shape[1]
    prediction = 4
    m = motion[:, :, None, :, :]
    m = jnp.broadcast_to(m, (batch, seq, prediction) + motion.shape[2:])
    m = m.reshape(-1, MOTION_IN).astype(jnp.float32)
    w, b, gamma, beta = params
    y = m @ w + b
    mean = jnp.mean(y, axis=0, keepdims=True)
    var = jnp.mean((y - mean) ** 2, axis=0, keepdims=True)
    z = jnp.maximum((y - mean) / jnp.sqrt(var + BN_EPS) * gamma + beta, 0.0)
    tw = jnp.asarray(PRED_TIME_WINDOW, dtype=jnp.float32)[None, :]
    tw = jnp.broadcast_to(tw, (batch * seq, prediction)).reshape(-1, 1)
    return jnp.concatenate([tw, z], axis=1)


if __name__ == "__main__":
    key = jax.random.PRNGKey(0)
    k_w, k_b, k_fov, k_mot, k_vid = jax.random.split(key, 5)

    # deterministic parameter init (shapes from nn.Linear(90,128) / BatchNorm1d(128))
    w = jax.random.normal(k_w, (MOTION_IN, MOTION_EMBED), jnp.float32) * 0.05
    b = jax.random.normal(k_b, (1, MOTION_EMBED), jnp.float32) * 0.01
    gamma = jnp.ones((1, MOTION_EMBED), jnp.float32)   # BatchNorm weight init
    beta = jnp.zeros((1, MOTION_EMBED), jnp.float32)   # BatchNorm bias init
    params = (w, b, gamma, beta)

    # small example inputs: batch=2, seq=8
    fov = jax.random.normal(k_fov, (2, 8, 16, 16), jnp.float32)      # only shape used
    motion = jax.random.normal(k_mot, (2, 8, 1, 90), jnp.float32)
    video = jax.random.normal(k_vid, (2, 8, 3, 8, 8), jnp.float32)   # unused

    out = motion_fov_prediction_forward(fov, motion, video, params)
    out = jax.block_until_ready(out)

    ref = reference_forward(fov, motion, params)
    assert out.shape == (2 * 8 * 4, FOV_FINAL_EMBED), out.shape
    assert jnp.allclose(out, ref, atol=1e-4, rtol=1e-4), "mismatch vs reference"

    print("KERNEL_OK")
</pallas_src>

<mosaic_0001>
module attributes {stable_mosaic.version = 11 : i64} {
  func.func @_stats_kernel(%arg0: i32, %arg1: memref<16x128xf32, #tpu.memory_space<vmem>>, %arg2: memref<128x128xf32, #tpu.memory_space<vmem>>, %arg3: memref<1x128xf32, #tpu.memory_space<vmem>>, %arg4: memref<1x128xf32, #tpu.memory_space<vmem>>) attributes {dimension_semantics = [#tpu.dimension_semantics<arbitrary>], iteration_bounds = array<i64: 1>, scalar_prefetch = 0 : i64, scratch_operands = 0 : i64, tpu.core_type = #tpu.core_type<tc>, window_params = [{transform_indices = @transform_0, window_bounds = array<i64: 16, 128>}, {pipeline_mode = #tpu.pipeline_mode<synchronous>, transform_indices = @transform_1, window_bounds = array<i64: 128, 128>}, {pipeline_mode = #tpu.pipeline_mode<synchronous>, transform_indices = @transform_2, window_bounds = array<i64: 1, 128>}, {pipeline_mode = #tpu.pipeline_mode<synchronous>, transform_indices = @transform_3, window_bounds = array<i64: 1, 128>}]} {
    %c0_i32 = arith.constant 0 : i32
    %0 = arith.cmpi eq, %arg0, %c0_i32 : i32
    %1 = arith.extui %0 : i1 to i32
    %c0_i32_0 = arith.constant 0 : i32
    %2 = arith.cmpi ne, %1, %c0_i32_0 : i32
    scf.if %2 {
      %cst_14 = arith.constant 0.000000e+00 : f32
      %17 = vector.broadcast %cst_14 : f32 to vector<1x128xf32>
      %c0_15 = arith.constant 0 : index
      %c0_16 = arith.constant 0 : index
      %18 = vector.load %arg3[%c0_15, %c0_16] : memref<1x128xf32, #tpu.memory_space<vmem>>, vector<1x128xf32>
      tpu.vector_store %arg3[%c0_15, %c0_16], %17 {strides = array<i32>} : memref<1x128xf32, #tpu.memory_space<vmem>>, vector<1x128xf32>,
      %cst_17 = arith.constant 0.000000e+00 : f32
      %19 = vector.broadcast %cst_17 : f32 to vector<1x128xf32>
      %c0_18 = arith.constant 0 : index
      %c0_19 = arith.constant 0 : index
      %20 = vector.load %arg4[%c0_18, %c0_19] : memref<1x128xf32, #tpu.memory_space<vmem>>, vector<1x128xf32>
      tpu.vector_store %arg4[%c0_18, %c0_19], %19 {strides = array<i32>} : memref<1x128xf32, #tpu.memory_space<vmem>>, vector<1x128xf32>,
    } else {
    }
    %c0 = arith.constant 0 : index
    %c0_1 = arith.constant 0 : index
    %3 = vector.load %arg1[%c0, %c0_1] : memref<16x128xf32, #tpu.memory_space<vmem>>, vector<16x128xf32>
    %c0_2 = arith.constant 0 : index
    %c0_3 = arith.constant 0 : index
    %4 = vector.load %arg2[%c0_2, %c0_3] : memref<128x128xf32, #tpu.memory_space<vmem>>, vector<128x128xf32>
    %cst = arith.constant dense<0.000000e+00> : vector<16x128xf32>
    %5 = tpu.matmul %3, %4, %cst {dimension_numbers = #tpu.dot_dimension_numbers<[1], [0], [0], [1], [0, 0, 1, 1], [], []>} : vector<16x128xf32>, vector<128x128xf32>, vector<16x128xf32> -> vector<16x128xf32>
    %c0_4 = arith.constant 0 : index
    %c0_5 = arith.constant 0 : index
    %6 = vector.load %arg3[%c0_4, %c0_5] : memref<1x128xf32, #tpu.memory_space<vmem>>, vector<1x128xf32>
    %cst_6 = arith.constant dense<0.000000e+00> : vector<128xf32>
    %7 = vector.multi_reduction <add>, %5, %cst_6 [0] : vector<16x128xf32> to vector<128xf32>
    %8 = vector.shape_cast %7 : vector<128xf32> to vector<1x128xf32>
    %9 = arith.addf %6, %8 : vector<1x128xf32>
    %c0_7 = arith.constant 0 : index
    %c0_8 = arith.constant 0 : index
    %10 = vector.load %arg3[%c0_7, %c0_8] : memref<1x128xf32, #tpu.memory_space<vmem>>, vector<1x128xf32>
    tpu.vector_store %arg3[%c0_7, %c0_8], %9 {strides = array<i32>} : memref<1x128xf32, #tpu.memory_space<vmem>>, vector<1x128xf32>,
    %c0_9 = arith.constant 0 : index
    %c0_10 = arith.constant 0 : index
    %11 = vector.load %arg4[%c0_9, %c0_10] : memref<1x128xf32, #tpu.memory_space<vmem>>, vector<1x128xf32>
    %12 = arith.mulf %5, %5 : vector<16x128xf32>
    %cst_11 = arith.constant dense<0.000000e+00> : vector<128xf32>
    %13 = vector.multi_reduction <add>, %12, %cst_11 [0] : vector<16x128xf32> to vector<128xf32>
    %14 = vector.shape_cast %13 : vector<128xf32> to vector<1x128xf32>
    %15 = arith.addf %11, %14 : vector<1x128xf32>
    %c0_12 = arith.constant 0 : index
    %c0_13 = arith.constant 0 : index
    %16 = vector.load %arg4[%c0_12, %c0_13] : memref<1x128xf32, #tpu.memory_space<vmem>>, vector<1x128xf32>
    tpu.vector_store %arg4[%c0_12, %c0_13], %15 {strides = array<i32>} : memref<1x128xf32, #tpu.memory_space<vmem>>, vector<1x128xf32>,
    return
  }
  func.func @transform_0(%arg0: i32) -> (i32, i32) {
    %c0_i32 = arith.constant 0 : i32
    %c0_i32_0 = arith.constant 0 : i32
    return %arg0, %c0_i32 : i32, i32
  }
  func.func @transform_1(%arg0: i32) -> (i32, i32) {
    %c0_i32 = arith.constant 0 : i32
    %c0_i32_0 = arith.constant 0 : i32
    %c0_i32_1 = arith.constant 0 : i32
    return %c0_i32, %c0_i32_0 : i32, i32
  }
  func.func @transform_2(%arg0: i32) -> (i32, i32) {
    %c0_i32 = arith.constant 0 : i32
    %c0_i32_0 = arith.constant 0 : i32
    %c0_i32_1 = arith.constant 0 : i32
    return %c0_i32, %c0_i32_0 : i32, i32
  }
  func.func @transform_3(%arg0: i32) -> (i32, i32) {
    %c0_i32 = arith.constant 0 : i32
    %c0_i32_0 = arith.constant 0 : i32
    %c0_i32_1 = arith.constant 0 : i32
    return %c0_i32, %c0_i32_0 : i32, i32
  }
}

</mosaic_0001>

<llo_original>
// kernel: tpu_custom_call.1
$region0: #{tpu_custom_call.1}
  #allocation0 [shape = 'u32[]', space=smem, size = 0x4, offset = 0x4, fixed_abs, tag = 'smem constant byte address 0x4 - core index']
  #allocation1 [shape = 'u32[144,128]{1,0:T(1,128)}', space=vmem, size = 0x12000, scoped, tag = 'internal scratch']
  %s0 = inlined_call_operand.hbm [shape: f32[16,128], index: 0, kind: input, shape index: {}]
  %s1 = inlined_call_operand.hbm [shape: f32[128,128], index: 1, kind: input, shape index: {}]
  %s2 = inlined_call_operand.hbm [shape: f32[1,128], index: 2, kind: output, shape index: {0}]
  %s3 = inlined_call_operand.hbm [shape: f32[1,128], index: 3, kind: output, shape index: {1}]
  %4 = xla_tuple %s2, %s3
  %s5 = sld [smem:[#allocation0]]
  $region38: #{tpu_custom_call.1} parent=0
    _
  %s7 = ssub.s32 1, %s5
  %s8 = scalar_select 0, %s7, %s5
  $region1: #{tpu_custom_call.1} parent=0
    #allocation2 [shape = 'u8[8192]{0}', space=vmem, size = 0x2000, scoped, tag = 'input window, operand 0, single buffered']
    #allocation3 [shape = 's32[1]{0}', space=sflag, size = 0x4, scoped, tag = 'scoped memory for tpu_custom_call.1']
    #allocation4 [shape = 's32[1]{0}', space=sflag, size = 0x4, scoped, tag = 'scoped memory for tpu_custom_call.1']
    #allocation5 [shape = 'u8[65536]{0}', space=vmem, size = 0x10000, scoped, tag = 'input window, operand 1, single buffered']
    #allocation6 [shape = 's32[1]{0}', space=sflag, size = 0x4, scoped, tag = 'scoped memory for tpu_custom_call.1']
    #allocation7 [shape = 'u8[512]{0}', space=vmem, size = 0x400, scoped, tag = 'output window, operand 0, single buffered']
    #allocation8 [shape = 'u8[512]{0}', space=vmem, size = 0x400, scoped, tag = 'output window, operand 1, single buffered']
    #allocation9 [shape = 's32[1]{0}', space=sflag, size = 0x4, scoped, tag = 'scoped memory for tpu_custom_call.1']
    %9 = vsyncpa [#allocation3], 0
    %10 = vsyncpa [#allocation6], 0
    %11 = vsyncpa [#allocation4], 0
    %12 = vsyncpa [#allocation9], 0
    // Predicated region
    $region2: #{tpu_custom_call.1} parent=1 // pred_check
      _
    $region3: #{tpu_custom_call.1} parent=1 // pred_check_branch
      %14 = sbr.rel (0) target = $region5
    $region4: #{tpu_custom_call.1} parent=1 // pred_region
      %s16 = ssub.s32 256, 256
      %17 = vsyncadd [#allocation3], %s16
      %s18 = sshll.u32 [#allocation2], 4
      %s19 = int_to_ptr.vmem [resolvable:$true] %s18
      %24 = dma.hbm_to_vmem [thread:$0]  %s0, 256, %s19, [#allocation3], 128, 128, 8
    $region5: #{tpu_custom_call.1} parent=1 // pred_fallthru
      _
    // Predicated region
    $region6: #{tpu_custom_call.1} parent=1 // pred_check
      _
    $region7: #{tpu_custom_call.1} parent=1 // pred_check_branch
      %26 = sbr.rel (0) target = $region9
    $region8: #{tpu_custom_call.1} parent=1 // pred_region
      %s28 = ssub.s32 2048, 2048
      %29 = vsyncadd [#allocation6], %s28
      %s30 = sshll.u32 [#allocation5], 4
      %s31 = int_to_ptr.vmem [resolvable:$true] %s30
      %36 = dma.hbm_to_vmem [thread:$0]  %s1, 2048, %s31, [#allocation6], 128, 128, 8
    $region9: #{tpu_custom_call.1} parent=1 // pred_fallthru
      _
    // Predicated region
    $region10: #{tpu_custom_call.1} parent=1 // pred_check
      _
    $region11: #{tpu_custom_call.1} parent=1 // pred_check_branch
      %38 = sbr.rel (0) target = $region13
    $region12: #{tpu_custom_call.1} parent=1 // pred_region
      %39 = dma.done [#allocation3], 256
    $region13: #{tpu_custom_call.1} parent=1 // pred_fallthru
      _
    // Predicated region
    $region14: #{tpu_custom_call.1} parent=1 // pred_check
      _
    $region15: #{tpu_custom_call.1} parent=1 // pred_check_branch
      %41 = sbr.rel (0) target = $region17
    $region16: #{tpu_custom_call.1} parent=1 // pred_region
      %42 = dma.done [#allocation6], 2048
    $region17: #{tpu_custom_call.1} parent=1 // pred_fallthru
      _
    %p43 = scmp.eq.s32.totalorder 0, 0
    // Predicated region
    $region18: #{tpu_custom_call.1} parent=1 // pred_check
      %p44 = pneg %p43
    $region19: #{tpu_custom_call.1} parent=1 // pred_check_branch
      %46 = sbr.rel (%p44) target = $region21
    $region20: #{tpu_custom_call.1} parent=1 // pred_region
      %47 = vst [vmem:[#allocation7] sm:$0x1] 0.0
      %48 = vst [vmem:[#allocation8] sm:$0x1] 0.0
    $region21: #{tpu_custom_call.1} parent=1 // pred_fallthru
      _
    %v49 = vld [vmem:[#allocation2] sm:$0xff]
    %v50 = vld [vmem:[#allocation2 + $0x8] sm:$0xff]
    %v51 = vld [vmem:[#allocation5] sm:$0xff]
    %v52 = vld [vmem:[#allocation5 + $0x8] sm:$0xff]
    %v53 = vld [vmem:[#allocation5 + $0x10] sm:$0xff]
    %v54 = vld [vmem:[#allocation5 + $0x18] sm:$0xff]
    %v55 = vld [vmem:[#allocation5 + $0x20] sm:$0xff]
    %v56 = vld [vmem:[#allocation5 + $0x28] sm:$0xff]
    %v57 = vld [vmem:[#allocation5 + $0x30] sm:$0xff]
    %v58 = vld [vmem:[#allocation5 + $0x38] sm:$0xff]
    %v59 = vld [vmem:[#allocation5 + $0x40] sm:$0xff]
    %v60 = vld [vmem:[#allocation5 + $0x48] sm:$0xff]
    %v61 = vld [vmem:[#allocation5 + $0x50] sm:$0xff]
    %v62 = vld [vmem:[#allocation5 + $0x58] sm:$0xff]
    %v63 = vld [vmem:[#allocation5 + $0x60] sm:$0xff]
    %v64 = vld [vmem:[#allocation5 + $0x68] sm:$0xff]
    %v65 = vld [vmem:[#allocation5 + $0x70] sm:$0xff]
    %v66 = vld [vmem:[#allocation5 + $0x78] sm:$0xff]
    %67 = vmatprep.subr.mxu0 0.0
    %68 = vmatpush1.msra.mxu0 %v51
    %69 = vmatprep.subr.mxu0 0.0
    %70 = vmatpush1.msra.mxu0 %v52
    %71 = vmatprep.subr.mxu0 0.0
    %72 = vmatpush1.msra.mxu0 %v53
    %73 = vmatprep.subr.mxu0 0.0
    %74 = vmatpush1.msra.mxu0 %v54
    %75 = vmatprep.subr.mxu0 0.0
    %76 = vmatpush1.msra.mxu0 %v55
    %77 = vmatprep.subr.mxu0 0.0
    %78 = vmatpush1.msra.mxu0 %v56
    %79 = vmatprep.subr.mxu0 0.0
    %80 = vmatpush1.msra.mxu0 %v57
    %81 = vmatprep.subr.mxu0 0.0
    %82 = vmatpush1.msra.mxu0 %v58
    %83 = vmatprep.subr.mxu0 0.0
    %84 = vmatpush1.msra.mxu0 %v59
    %85 = vmatprep.subr.mxu0 0.0
    %86 = vmatpush1.msra.mxu0 %v60
    %87 = vmatprep.subr.mxu0 0.0
    %88 = vmatpush1.msra.mxu0 %v61
    %89 = vmatprep.subr.mxu0 0.0
    %90 = vmatpush1.msra.mxu0 %v62
    %91 = vmatprep.subr.mxu0 0.0
    %92 = vmatpush1.msra.mxu0 %v63
    %93 = vmatprep.subr.mxu0 0.0
    %94 = vmatpush1.msra.mxu0 %v64
    %95 = vmatprep.subr.mxu0 0.0
    %96 = vmatpush1.msra.mxu0 %v65
    %97 = vmatprep.subr.mxu0 0.0
    %98 = vmatpush1.msra.mxu0 %v66
    %99 = vmatprep.subr.mxu0 0.0
    %100 = vmatpush1.msra.mxu0 0.0
    %101 = vmatprep.subr.mxu0 0.0
    %102 = vmatpush1.msra.mxu0 0.0
    %103 = vmatprep.subr.mxu0 0.0
    %104 = vmatpush1.msra.mxu0 0.0
    %105 = vmatprep.subr.mxu0 0.0
    %106 = vmatpush1.msra.mxu0 0.0
    %107 = vmatprep.subr.mxu0 0.0
    %108 = vmatpush1.msra.mxu0 0.0
    %109 = vmatprep.subr.mxu0 0.0
    %110 = vmatpush1.msra.mxu0 0.0
    %111 = vmatprep.subr.mxu0 0.0
    %112 = vmatpush1.msra.mxu0 0.0
    %113 = vmatprep.subr.mxu0 0.0
    %114 = vmatpush1.msra.mxu0 0.0
    %115 = vmatprep.subr.mxu0 0.0
    %116 = vmatpush1.msra.mxu0 0.0
    %117 = vmatprep.subr.mxu0 0.0
    %118 = vmatpush1.msra.mxu0 0.0
    %119 = vmatprep.subr.mxu0 0.0
    %120 = vmatpush1.msra.mxu0 0.0
    %121 = vmatprep.subr.mxu0 0.0
    %122 = vmatpush1.msra.mxu0 0.0
    %123 = vmatprep.subr.mxu0 0.0
    %124 = vmatpush1.msra.mxu0 0.0
    %125 = vmatprep.subr.mxu0 0.0
    %126 = vmatpush1.msra.mxu0 0.0
    %127 = vmatprep.subr.mxu0 0.0
    %128 = vmatpush1.msra.mxu0 0.0
    %129 = vmatprep.subr.mxu0 0.0
    %130 = vmatpush1.msra.mxu0 0.0
    %131 = vmatprep.mubr.f32.mxu0 0.0
    %132 = vmatmul.mubr.f32.gmra.mrb[0].mxu0 %v49
    %v133 = vpop.f32.mrb[0].mxu0
    %v134 = vadd.f32 0.0, %v133
    %v135 = vpop.f32.mrb[0].mxu0
    %136 = vmatprep.mubr.f32.mxu0 0.0
    %137 = vmatmul.mubr.f32.gmra.mrb[0].mxu0 %v50
    %v138 = vpop.f32.mrb[0].mxu0
    %v139 = vadd.f32 0.0, %v138
    %v140 = vpop.f32.mrb[0].mxu0
    %141 = vdwg.mxu0
    %v142 = vld [vmem:[#allocation7] sm:$0x1]
    %v143 = vadd.f32 %v134, %v139
    %v144 = vrot.slane %v143, 4
    %v145 = vadd.f32 %v143, %v144
    %v146 = vrot.slane %v145, 2
    %v147 = vadd.f32 %v145, %v146
    %v148 = vrot.slane %v147, 1
    %v149 = vadd.f32 %v147, %v148
    %v150 = vadd.f32 %v142, %v149
    %151 = vst [vmem:[#allocation7] sm:$0x1] %v150
    %v152 = vld [vmem:[#allocation8] sm:$0x1]
    %v153 = vmul.f32 %v134, %v134
    %v154 = vmul.f32 %v139, %v139
    %v155 = vadd.f32 %v153, %v154
    %v156 = vrot.slane %v155, 4
    %v157 = vadd.f32 %v155, %v156
    %v158 = vrot.slane %v157, 2
    %v159 = vadd.f32 %v157, %v158
    %v160 = vrot.slane %v159, 1
    %v161 = vadd.f32 %v159, %v160
    %v162 = vadd.f32 %v152, %v161
    %163 = vst [vmem:[#allocation8] sm:$0x1] %v162
    // Predicated region
    $region22: #{tpu_custom_call.1} parent=1 // pred_check
      _
    $region23: #{tpu_custom_call.1} parent=1 // pred_check_branch
      %165 = sbr.rel (0) target = $region25
    $region24: #{tpu_custom_call.1} parent=1 // pred_region
      %s167 = ssub.s32 16, 16
      %168 = vsyncadd [#allocation4], %s167
      %s170 = sshll.u32 [#allocation7], 4
      %s171 = int_to_ptr.vmem [resolvable:$true] %s170
      %173 = dma.vmem_to_hbm [thread:$0]  %s171, 16, %s2, [#allocation4]
    $region25: #{tpu_custom_call.1} parent=1 // pred_fallthru
      _
    // Predicated region
    $region26: #{tpu_custom_call.1} parent=1 // pred_check
      _
    $region27: #{tpu_custom_call.1} parent=1 // pred_check_branch
      %175 = sbr.rel (0) target = $region29
    $region28: #{tpu_custom_call.1} parent=1 // pred_region
      %s177 = ssub.s32 16, 16
      %178 = vsyncadd [#allocation9], %s177
      %s180 = sshll.u32 [#allocation8], 4
      %s181 = int_to_ptr.vmem [resolvable:$true] %s180
      %183 = dma.vmem_to_hbm [thread:$0]  %s181, 16, %s3, [#allocation9]
    $region29: #{tpu_custom_call.1} parent=1 // pred_fallthru
      _
    // Predicated region
    $region30: #{tpu_custom_call.1} parent=1 // pred_check
      _
    $region31: #{tpu_custom_call.1} parent=1 // pred_check_branch
      %185 = sbr.rel (0) target = $region33
    $region32: #{tpu_custom_call.1} parent=1 // pred_region
      %186 = dma.done [#allocation4], 16
    $region33: #{tpu_custom_call.1} parent=1 // pred_fallthru
      _
    // Predicated region
    $region34: #{tpu_custom_call.1} parent=1 // pred_check
      _
    $region35: #{tpu_custom_call.1} parent=1 // pred_check_branch
      %188 = sbr.rel (0) target = $region37
    $region36: #{tpu_custom_call.1} parent=1 // pred_region
      %189 = dma.done [#allocation9], 16
    $region37: #{tpu_custom_call.1} parent=1 // pred_fallthru
      _
    %190 = vsyncpa [#allocation3], 1
    %191 = vsyncpa [#allocation6], 1
    %192 = vsyncpa [#allocation4], 1
    %193 = vsyncpa [#allocation9], 1

</llo_original>
